<compile_context>
chip_gen: v5e
topology: v5e:2x2
jax: 0.10.0
libtpu: 0.0.40
codegen_flags: <defaults>
</compile_context>

<pallas_src>
import functools
import math

import jax
import jax.numpy as jnp
from jax.experimental import pallas as pl
from jax.experimental.pallas import tpu as pltpu


def _default_vmem_limit_bytes():
    # v5e/v6e have 128 MiB physical VMEM, v7x only 64 MiB per TensorCore; leave headroom
    # for Mosaic internal scratch / semaphores instead of claiming the whole thing.
    try:
        cap = int(pltpu.get_tpu_info().vmem_capacity_bytes)
    except Exception:
        cap = 64 * 1024 * 1024
    return max(32 * 1024 * 1024, min(cap - 16 * 1024 * 1024, 100 * 1024 * 1024))


_VMEM_LIMIT = _default_vmem_limit_bytes()


def _pick_tile(dim, candidates):
    """Largest candidate tile that evenly divides `dim`; otherwise the full dim (legal)."""
    for c in candidates:
        if dim >= c and dim % c == 0:
            return c
    return dim


# ---------------------------------------------------------------------------
# Tiled linear projection: y = x @ w   (x: (M,K), w: (K,N), y: (M,N))
# ---------------------------------------------------------------------------
def _matmul_kernel(x_ref, w_ref, o_ref, acc_ref):
    @pl.when(pl.program_id(2) == 0)
    def _init():
        acc_ref[...] = jnp.zeros_like(acc_ref)

    acc_ref[...] += jnp.dot(x_ref[...], w_ref[...], preferred_element_type=jnp.float32)

    @pl.when(pl.program_id(2) == pl.num_programs(2) - 1)
    def _finalize():
        o_ref[...] = acc_ref[...].astype(o_ref.dtype)


def pallas_matmul(x, w):
    M, K = x.shape
    K2, N = w.shape
    assert K == K2
    tm = _pick_tile(M, (512, 256, 128, 64, 32, 16))
    tn = _pick_tile(N, (512, 256, 128))          # lane dim: multiple of 128 or full
    tk = _pick_tile(K, (512, 256, 128))
    grid = (M // tm, N // tn, K // tk)
    return pl.pallas_call(
        _matmul_kernel,
        out_shape=jax.ShapeDtypeStruct((M, N), x.dtype),
        grid=grid,
        in_specs=[
            pl.BlockSpec((tm, tk), lambda i, j, k: (i, k)),
            pl.BlockSpec((tk, tn), lambda i, j, k: (k, j)),
        ],
        out_specs=pl.BlockSpec((tm, tn), lambda i, j, k: (i, j)),
        scratch_shapes=[pltpu.VMEM((tm, tn), jnp.float32)],
        compiler_params=pltpu.CompilerParams(
            dimension_semantics=("parallel", "parallel", "arbitrary"),
            vmem_limit_bytes=_VMEM_LIMIT,
        ),
    )(x, w)


# ---------------------------------------------------------------------------
# Flash attention (online softmax), heads vectorized inside the block.
#   q: (B, H, Sq, dk)  k: (B, H, Sk, dk)  v: (B, H, Sk, dv)  ->  o: (B, H, Sq, dv)
#   grid = (B, Sq//tq, Sk//tkv), kv axis last and "arbitrary".
#   NOTE: softmax scale is folded into W_q, so this kernel applies no scaling.
# ---------------------------------------------------------------------------
def _flash_attn_kernel(q_ref, k_ref, v_ref, o_ref, m_sc, l_sc, acc_sc, *, causal, tq, tkv):
    qi = pl.program_id(1)
    ki = pl.program_id(2)

    @pl.when(ki == 0)
    def _init():
        m_sc[...] = jnp.full_like(m_sc, -jnp.inf)
        l_sc[...] = jnp.zeros_like(l_sc)
        acc_sc[...] = jnp.zeros_like(acc_sc)

    def _compute():
        q = q_ref[0]          # (H, tq, dk)
        k = k_ref[0]          # (H, tkv, dk)
        v = v_ref[0]          # (H, tkv, dv)
        # batched over heads, contraction on the last dims -> no explicit transpose
        s = jnp.einsum('hqd,hkd->hqk', q, k,
                       preferred_element_type=jnp.float32)            # (H, tq, tkv)
        if causal:
            row = qi * tq + jax.lax.broadcasted_iota(jnp.int32, (tq, tkv), 0)
            col = ki * tkv + jax.lax.broadcasted_iota(jnp.int32, (tq, tkv), 1)
            s = jnp.where((col <= row)[None, :, :], s, jnp.float32(-1e9))
        m_prev = m_sc[...]                                             # (H, tq, 1)
        m_new = jnp.maximum(m_prev, jnp.max(s, axis=-1, keepdims=True))
        alpha = jnp.exp(m_prev - m_new)
        p = jnp.exp(s - m_new)                                         # (H, tq, tkv)
        l_sc[...] = alpha * l_sc[...] + jnp.sum(p, axis=-1, keepdims=True)
        acc_sc[...] = alpha * acc_sc[...] + jnp.einsum(
            'hqk,hkd->hqd', p.astype(v.dtype), v, preferred_element_type=jnp.float32)
        m_sc[...] = m_new

    if causal:
        # skip kv tiles that lie entirely above the causal diagonal
        pl.when(ki * tkv <= qi * tq + (tq - 1))(_compute)
    else:
        _compute()

    @pl.when(ki == pl.num_programs(2) - 1)
    def _finalize():
        inv_l = pl.reciprocal(l_sc[...], approx=True)                  # EUP, ~free slot
        o_ref[0] = (acc_sc[...] * inv_l).astype(o_ref.dtype)


def pallas_flash_attention(q, k, v, *, causal, tq=None, tkv=None):
    B, H, Sq, dk = q.shape
    _, _, Sk, dk2 = k.shape
    dv = v.shape[-1]
    assert dk == dk2
    if tq is None:
        tq = _pick_tile(Sq, (256, 128, 64, 32, 16))
    if tkv is None:
        tkv = _pick_tile(Sk, (512, 256, 128, 64, 32, 16))
    assert Sq % tq == 0 and Sk % tkv == 0
    grid = (B, Sq // tq, Sk // tkv)

    if causal:
        # Clamp the K/V block index to the diagonal block for skipped (above-diagonal)
        # steps: same block index => Pallas elides the DMA (no wasted KV HBM traffic).
        def _kv_block(qi, ki):
            return jnp.minimum(ki, (qi * tq + tq - 1) // tkv)
        k_imap = lambda b, qi, ki: (b, 0, _kv_block(qi, ki), 0)
        v_imap = lambda b, qi, ki: (b, 0, _kv_block(qi, ki), 0)
    else:
        k_imap = lambda b, qi, ki: (b, 0, ki, 0)
        v_imap = lambda b, qi, ki: (b, 0, ki, 0)

    kernel = functools.partial(_flash_attn_kernel, causal=causal, tq=tq, tkv=tkv)
    return pl.pallas_call(
        kernel,
        out_shape=jax.ShapeDtypeStruct((B, H, Sq, dv), q.dtype),
        grid=grid,
        in_specs=[
            pl.BlockSpec((1, H, tq, dk), lambda b, qi, ki: (b, 0, qi, 0)),
            pl.BlockSpec((1, H, tkv, dk), k_imap),
            pl.BlockSpec((1, H, tkv, dv), v_imap),
        ],
        out_specs=pl.BlockSpec((1, H, tq, dv), lambda b, qi, ki: (b, 0, qi, 0)),
        scratch_shapes=[
            pltpu.VMEM((H, tq, 1), jnp.float32),    # running max m
            pltpu.VMEM((H, tq, 1), jnp.float32),    # running denom l
            pltpu.VMEM((H, tq, dv), jnp.float32),   # f32 accumulator
        ],
        compiler_params=pltpu.CompilerParams(
            dimension_semantics=("parallel", "parallel", "arbitrary"),
            vmem_limit_bytes=_VMEM_LIMIT,
        ),
    )(q, k, v)


# ---------------------------------------------------------------------------
# Fused attention + exact probabilities (visualization path): one pass produces
# both the attention output and softmax probs, instead of a separate QK recompute.
#   q: (B, H, Sq, dk)  k/v: (B, H, Sk, dk/dv)  ->  o: (B, H, Sq, dv), p: (B, H, Sq, Sk)
# ---------------------------------------------------------------------------
def _attn_with_probs_kernel(q_ref, k_ref, v_ref, o_ref, p_ref, *, causal, tq):
    qi = pl.program_id(1)
    q = q_ref[0]          # (H, tq, dk)
    k = k_ref[0]          # (H, Sk, dk)
    v = v_ref[0]          # (H, Sk, dv)
    Sk = k.shape[1]
    s = jnp.einsum('hqd,hkd->hqk', q, k, preferred_element_type=jnp.float32)
    if causal:
        row = qi * tq + jax.lax.broadcasted_iota(jnp.int32, (tq, Sk), 0)
        col = jax.lax.broadcasted_iota(jnp.int32, (tq, Sk), 1)
        s = jnp.where((col <= row)[None, :, :], s, jnp.float32(-1e9))
    m = jnp.max(s, axis=-1, keepdims=True)
    e = jnp.exp(s - m)
    denom = jnp.sum(e, axis=-1, keepdims=True)
    p = e / denom                                        # exact softmax for visualization
    p_ref[0] = p.astype(p_ref.dtype)
    o_ref[0] = jnp.einsum('hqk,hkd->hqd', p.astype(v.dtype), v,
                          preferred_element_type=jnp.float32).astype(o_ref.dtype)


def pallas_attention_with_probs(q, k, v, *, causal, tq=None):
    # TODO(synk): viz path keeps the full Sk per block (probs are O(Sq*Sk) anyway);
    # for very long sequences it would need kv tiling of the score stash.
    B, H, Sq, dk = q.shape
    _, _, Sk, _ = k.shape
    dv = v.shape[-1]
    if tq is None:
        tq = _pick_tile(Sq, (128, 64, 32, 16))
    assert Sq % tq == 0
    grid = (B, Sq // tq)
    kernel = functools.partial(_attn_with_probs_kernel, causal=causal, tq=tq)
    return pl.pallas_call(
        kernel,
        out_shape=(jax.ShapeDtypeStruct((B, H, Sq, dv), q.dtype),
                   jax.ShapeDtypeStruct((B, H, Sq, Sk), jnp.float32)),
        grid=grid,
        in_specs=[
            pl.BlockSpec((1, H, tq, dk), lambda b, qi: (b, 0, qi, 0)),
            pl.BlockSpec((1, H, Sk, dk), lambda b, qi: (b, 0, 0, 0)),
            pl.BlockSpec((1, H, Sk, dv), lambda b, qi: (b, 0, 0, 0)),
        ],
        out_specs=(pl.BlockSpec((1, H, tq, dv), lambda b, qi: (b, 0, qi, 0)),
                   pl.BlockSpec((1, H, tq, Sk), lambda b, qi: (b, 0, qi, 0))),
        compiler_params=pltpu.CompilerParams(
            dimension_semantics=("parallel", "parallel"),
            vmem_limit_bytes=_VMEM_LIMIT,
        ),
    )(q, k, v)


# ---------------------------------------------------------------------------
# MultiHeadAttention forward (mirrors the PyTorch module)
# ---------------------------------------------------------------------------
class MultiHeadAttentionPallas:
    def __init__(self, num_heads, d_model, d_k, d_v, causal, key,
                 save_attn_scores_to_visualize=True, compute_dtype=None):
        assert d_model % num_heads == 0, "d_model should be divisible by num_heads"
        self.num_heads = num_heads
        self.d_model = d_model
        self.d_k = d_k
        self.d_v = d_v
        self.causal = causal
        self.save_attn_scores_to_visualize = save_attn_scores_to_visualize
        self.attn_scores = None
        self.compute_dtype = compute_dtype   # e.g. jnp.bfloat16 on v6e/v7x

        k1, k2, k3, k4 = jax.random.split(key, 4)
        # PyTorch nn.Linear weight is (out, in); stored pre-transposed as (in, out)
        scale = 1.0 / math.sqrt(d_model)
        self.W_q = jax.random.uniform(k1, (d_model, num_heads * d_k), jnp.float32, -scale, scale)
        self.W_k = jax.random.uniform(k2, (d_model, num_heads * d_k), jnp.float32, -scale, scale)
        self.W_v = jax.random.uniform(k3, (d_model, num_heads * d_v), jnp.float32, -scale, scale)
        scale_o = 1.0 / math.sqrt(num_heads * d_v)
        self.W_o = jax.random.uniform(k4, (num_heads * d_v, d_model), jnp.float32, -scale_o, scale_o)
        # fold the 1/sqrt(d_k) softmax scale into the Q projection (mathematically identical)
        self._W_q_s = self.W_q * (1.0 / math.sqrt(d_k))
        # fused projection weight for self-attention (one matmul, one HBM activation read)
        self._W_qkv_s = jnp.concatenate([self._W_q_s, self.W_k, self.W_v], axis=1)

    def _cast(self, x):
        return x if self.compute_dtype is None else x.astype(self.compute_dtype)

    @staticmethod
    def _split_heads(x2d, B, L, H, d):
        # (B*L, H*d) -> (B, H, L, d)
        return x2d.reshape(B, L, H, d).transpose(0, 2, 1, 3)

    def __call__(self, Q, K, V, pad_attn_mask=None, self_attention=None):
        # TODO(synk): optional pad_attn_mask input not implemented (causal / no-mask only).
        assert pad_attn_mask is None, "pad_attn_mask not supported in this Pallas port"
        B, Lq, D = Q.shape
        Lk, Lv = K.shape[1], V.shape[1]
        assert Lk == Lv, "len_k and len_v must be equal"
        H, dk, dv = self.num_heads, self.d_k, self.d_v

        if self_attention is None:
            self_attention = (Q is K) and (K is V)

        if self_attention:
            # single fused projection (reads activations from HBM once)
            qkv = pallas_matmul(self._cast(Q.reshape(B * Lq, D)), self._cast(self._W_qkv_s))
            q2 = qkv[:, :H * dk]
            k2 = qkv[:, H * dk:2 * H * dk]
            v2 = qkv[:, 2 * H * dk:]
        else:
            q2 = pallas_matmul(self._cast(Q.reshape(B * Lq, D)), self._cast(self._W_q_s))
            k2 = pallas_matmul(self._cast(K.reshape(B * Lk, D)), self._cast(self.W_k))
            v2 = pallas_matmul(self._cast(V.reshape(B * Lv, D)), self._cast(self.W_v))

        q = self._split_heads(q2, B, Lq, H, dk)   # (B, H, Lq, dk)
        k = self._split_heads(k2, B, Lk, H, dk)   # (B, H, Lk, dk)
        v = self._split_heads(v2, B, Lv, H, dv)   # (B, H, Lk, dv)

        if self.save_attn_scores_to_visualize:
            out_h, probs = pallas_attention_with_probs(q, k, v, causal=self.causal)
            self.attn_scores = probs
        else:
            out_h = pallas_flash_attention(q, k, v, causal=self.causal)

        # (B, H, Lq, dv) -> (B*Lq, H*dv) merged heads, then output projection
        merged = out_h.transpose(0, 2, 1, 3).reshape(B * Lq, H * dv)
        out = pallas_matmul(merged, self._cast(self.W_o))
        return out.reshape(B, Lq, self.d_model)


# ---------------------------------------------------------------------------
# Pure-JAX references for validation
# ---------------------------------------------------------------------------
def reference_forward(mha, Q, K, V):
    B, Lq, D = Q.shape
    Lk = K.shape[1]
    H, dk, dv = mha.num_heads, mha.d_k, mha.d_v
    q = (Q @ mha.W_q).reshape(B, Lq, H, dk).transpose(0, 2, 1, 3)
    k = (K @ mha.W_k).reshape(B, Lk, H, dk).transpose(0, 2, 1, 3)
    v = (V @ mha.W_v).reshape(B, Lk, H, dv).transpose(0, 2, 1, 3)
    s = jnp.einsum("bhqd,bhkd->bhqk", q, k) / math.sqrt(dk)
    if mha.causal:
        mask = jnp.tril(jnp.ones((Lq, Lk), dtype=bool))
        s = jnp.where(mask[None, None], s, -1e9)
    p = jax.nn.softmax(s, axis=-1)
    o = jnp.einsum("bhqk,bhkd->bhqd", p, v)
    o = o.transpose(0, 2, 1, 3).reshape(B, Lq, H * dv)
    return o @ mha.W_o, p


def reference_attention(q, k, v, causal):
    s = jnp.einsum("bhqd,bhkd->bhqk", q, k)
    if causal:
        Sq, Sk = s.shape[-2], s.shape[-1]
        mask = jnp.tril(jnp.ones((Sq, Sk), dtype=bool))
        s = jnp.where(mask[None, None], s, -1e9)
    p = jax.nn.softmax(s, axis=-1)
    return jnp.einsum("bhqk,bhkd->bhqd", p, v)


if __name__ == "__main__":
    key = jax.random.PRNGKey(0)
    k_w1, k_w2, k_x, k_q, k_k, k_v, k_f = jax.random.split(key, 7)

    batch, seq, d_model = 2, 8, 32
    num_heads, d_k, d_v = 4, 8, 8

    # 1) causal self-attention with visualization (fused output+probs kernel, fused QKV proj)
    mha_c = MultiHeadAttentionPallas(num_heads, d_model, d_k, d_v, causal=True,
                                     key=k_w1, save_attn_scores_to_visualize=True)
    X = jax.random.normal(k_x, (batch, seq, d_model), jnp.float32)
    out_c = jax.block_until_ready(mha_c(X, X, X, self_attention=True))
    ref_c, ref_pc = reference_forward(mha_c, X, X, X)
    assert out_c.shape == (batch, seq, d_model)
    assert jnp.allclose(out_c, ref_c, atol=2e-2, rtol=2e-2), "causal self-attn mismatch"
    assert mha_c.attn_scores.shape == (batch, num_heads, seq, seq)
    assert jnp.allclose(mha_c.attn_scores, ref_pc, atol=2e-2, rtol=2e-2), "probs mismatch"

    # 2) non-causal cross-attention, no viz (separate projections + flash kernel)
    mha_x = MultiHeadAttentionPallas(num_heads, d_model, d_k, d_v, causal=False,
                                     key=k_w2, save_attn_scores_to_visualize=False)
    Q = jax.random.normal(k_q, (batch, seq, d_model), jnp.float32)
    K = jax.random.normal(k_k, (batch, seq, d_model), jnp.float32)
    V = jax.random.normal(k_v, (batch, seq, d_model), jnp.float32)
    out_x = jax.block_until_ready(mha_x(Q, K, V))
    ref_x, _ = reference_forward(mha_x, Q, K, V)
    assert jnp.allclose(out_x, ref_x, atol=2e-2, rtol=2e-2), "cross-attn mismatch"
    assert mha_x.attn_scores is None

    # 3) causal self-attention without viz (causal flash kernel, same weights as #1)
    mha_c2 = MultiHeadAttentionPallas(num_heads, d_model, d_k, d_v, causal=True,
                                      key=k_w1, save_attn_scores_to_visualize=False)
    out_c2 = jax.block_until_ready(mha_c2(X, X, X, self_attention=True))
    assert jnp.allclose(out_c2, ref_c, atol=2e-2, rtol=2e-2), "causal flash mismatch"

    # 4) multi-kv-tile causal flash (exercises online softmax across tiles, the pl.when
    #    compute skip and the clamped K/V index_map DMA elision)
    kq, kk, kv = jax.random.split(k_f, 3)
    Bf, Hf, Sf, dkf, dvf = 1, 2, 128, 8, 8
    qf = jax.random.normal(kq, (Bf, Hf, Sf, dkf), jnp.float32)
    kf = jax.random.normal(kk, (Bf, Hf, Sf, dkf), jnp.float32)
    vf = jax.random.normal(kv, (Bf, Hf, Sf, dvf), jnp.float32)
    of = jax.block_until_ready(
        pallas_flash_attention(qf, kf, vf, causal=True, tq=32, tkv=32))
    ref_f = reference_attention(qf, kf, vf, causal=True)
    assert jnp.allclose(of, ref_f, atol=2e-2, rtol=2e-2), "multi-tile flash mismatch"

    print("KERNEL_OK")
</pallas_src>

<mosaic_0001>
module attributes {stable_mosaic.version = 11 : i64} {
  func.func @_matmul_kernel(%arg0: i32, %arg1: i32, %arg2: i32, %arg3: memref<16x32xf32, #tpu.memory_space<vmem>>, %arg4: memref<32x96xf32, #tpu.memory_space<vmem>>, %arg5: memref<16x96xf32, #tpu.memory_space<vmem>>, %arg6: memref<16x96xf32, #tpu.memory_space<vmem>>) attributes {dimension_semantics = [#tpu.dimension_semantics<parallel>, #tpu.dimension_semantics<parallel>, #tpu.dimension_semantics<arbitrary>], iteration_bounds = array<i64: 1, 1, 1>, scalar_prefetch = 0 : i64, scratch_operands = 1 : i64, tpu.core_type = #tpu.core_type<tc>, window_params = [{transform_indices = @transform_0, window_bounds = array<i64: 16, 32>}, {transform_indices = @transform_1, window_bounds = array<i64: 32, 96>}, {transform_indices = @transform_2, window_bounds = array<i64: 16, 96>}]} {
    %c0_i32 = arith.constant 0 : i32
    %0 = arith.cmpi eq, %arg2, %c0_i32 : i32
    %1 = arith.extui %0 : i1 to i32
    %c0_i32_0 = arith.constant 0 : i32
    %2 = arith.cmpi ne, %1, %c0_i32_0 : i32
    scf.if %2 {
      %cst_10 = arith.constant 0.000000e+00 : f32
      %12 = vector.broadcast %cst_10 : f32 to vector<16x96xf32>
      %c0_11 = arith.constant 0 : index
      %c0_12 = arith.constant 0 : index
      %13 = vector.load %arg6[%c0_11, %c0_12] : memref<16x96xf32, #tpu.memory_space<vmem>>, vector<16x96xf32>
      tpu.vector_store %arg6[%c0_11, %c0_12], %12 {strides = array<i32>} : memref<16x96xf32, #tpu.memory_space<vmem>>, vector<16x96xf32>,
    } else {
    }
    %c0 = arith.constant 0 : index
    %c0_1 = arith.constant 0 : index
    %3 = vector.load %arg6[%c0, %c0_1] : memref<16x96xf32, #tpu.memory_space<vmem>>, vector<16x96xf32>
    %c0_2 = arith.constant 0 : index
    %c0_3 = arith.constant 0 : index
    %4 = vector.load %arg3[%c0_2, %c0_3] : memref<16x32xf32, #tpu.memory_space<vmem>>, vector<16x32xf32>
    %c0_4 = arith.constant 0 : index
    %c0_5 = arith.constant 0 : index
    %5 = vector.load %arg4[%c0_4, %c0_5] : memref<32x96xf32, #tpu.memory_space<vmem>>, vector<32x96xf32>
    %cst = arith.constant dense<0.000000e+00> : vector<16x96xf32>
    %6 = tpu.matmul %4, %5, %cst {dimension_numbers = #tpu.dot_dimension_numbers<[1], [0], [0], [1], [0, 0, 1, 1], [], []>} : vector<16x32xf32>, vector<32x96xf32>, vector<16x96xf32> -> vector<16x96xf32>
    %7 = arith.addf %3, %6 : vector<16x96xf32>
    %c0_6 = arith.constant 0 : index
    %c0_7 = arith.constant 0 : index
    %8 = vector.load %arg6[%c0_6, %c0_7] : memref<16x96xf32, #tpu.memory_space<vmem>>, vector<16x96xf32>
    tpu.vector_store %arg6[%c0_6, %c0_7], %7 {strides = array<i32>} : memref<16x96xf32, #tpu.memory_space<vmem>>, vector<16x96xf32>,
    %c0_i32_8 = arith.constant 0 : i32
    %9 = arith.cmpi eq, %arg2, %c0_i32_8 : i32
    %10 = arith.extui %9 : i1 to i32
    %c0_i32_9 = arith.constant 0 : i32
    %11 = arith.cmpi ne, %10, %c0_i32_9 : i32
    scf.if %11 {
      %c0_10 = arith.constant 0 : index
      %c0_11 = arith.constant 0 : index
      %12 = vector.load %arg6[%c0_10, %c0_11] : memref<16x96xf32, #tpu.memory_space<vmem>>, vector<16x96xf32>
      %c0_12 = arith.constant 0 : index
      %c0_13 = arith.constant 0 : index
      %13 = vector.load %arg5[%c0_12, %c0_13] : memref<16x96xf32, #tpu.memory_space<vmem>>, vector<16x96xf32>
      tpu.vector_store %arg5[%c0_12, %c0_13], %12 {strides = array<i32>} : memref<16x96xf32, #tpu.memory_space<vmem>>, vector<16x96xf32>,
    } else {
    }
    return
  }
  func.func @transform_0(%arg0: i32, %arg1: i32, %arg2: i32) -> (i32, i32) {
    %c0_i32 = arith.constant 0 : i32
    return %arg0, %arg2 : i32, i32
  }
  func.func @transform_1(%arg0: i32, %arg1: i32, %arg2: i32) -> (i32, i32) {
    %c0_i32 = arith.constant 0 : i32
    return %arg2, %arg1 : i32, i32
  }
  func.func @transform_2(%arg0: i32, %arg1: i32, %arg2: i32) -> (i32, i32) {
    %c0_i32 = arith.constant 0 : i32
    return %arg0, %arg1 : i32, i32
  }
}

</mosaic_0001>

<llo_original>
// kernel: tpu_custom_call.1
$region0: #{tpu_custom_call.1}
  #allocation0 [shape = 'u32[]', space=smem, size = 0x4, offset = 0x4, fixed_abs, tag = 'smem constant byte address 0x4 - core index']
  #allocation1 [shape = 'u32[72,128]{1,0:T(1,128)}', space=vmem, size = 0x9000, scoped, tag = 'internal scratch']
  #allocation2 [shape = 'f32[16,96]{1,0:T(8,128)}', space=vmem, size = 0x2000, scoped, tag = 'scratch operand']
  %s0 = inlined_call_operand.hbm [shape: f32[16,32], index: 0, kind: input, shape index: {}]
  %s1 = inlined_call_operand.hbm [shape: f32[32,96], index: 1, kind: input, shape index: {}]
  %s2 = inlined_call_operand.hbm [shape: f32[16,96], index: 2, kind: output, shape index: {}]
  %s3 = sld [smem:[#allocation0]]
  $region34: #{tpu_custom_call.1} parent=0
    _
  %s5 = ssub.s32 1, %s3
  %s6 = scalar_select 0, %s5, %s3
  $region1: #{tpu_custom_call.1} parent=0
    #allocation3 [shape = 'u8[8192]{0}', space=vmem, size = 0x2000, scoped, tag = 'input window, operand 0, single buffered']
    #allocation4 [shape = 's32[1]{0}', space=sflag, size = 0x4, scoped, tag = 'scoped memory for tpu_custom_call.1']
    #allocation5 [shape = 's32[1]{0}', space=sflag, size = 0x4, scoped, tag = 'scoped memory for tpu_custom_call.1']
    #allocation6 [shape = 'u8[16384]{0}', space=vmem, size = 0x4000, scoped, tag = 'input window, operand 1, single buffered']
    #allocation7 [shape = 's32[1]{0}', space=sflag, size = 0x4, scoped, tag = 'scoped memory for tpu_custom_call.1']
    #allocation8 [shape = 'u8[8192]{0}', space=vmem, size = 0x2000, scoped, tag = 'output window, operand 0, single buffered']
    %7 = vsyncpa [#allocation4], 0
    %8 = vsyncpa [#allocation7], 0
    %9 = vsyncpa [#allocation5], 0
    // Predicated region
    $region2: #{tpu_custom_call.1} parent=1 // pred_check
      _
    $region3: #{tpu_custom_call.1} parent=1 // pred_check_branch
      %11 = sbr.rel (0) target = $region5
    $region4: #{tpu_custom_call.1} parent=1 // pred_region
      %13 = vsyncadd [#allocation4], 0
      %s14 = sshll.u32 %s0, 4
      %s15 = int_to_ptr.hbm [resolvable:$true] %s14
      %s16 = sshll.u32 [#allocation3], 4
      %s17 = int_to_ptr.vmem [resolvable:$true] %s16
      %22 = dma.hbm_to_vmem [thread:$0]  %s15, 256, %s17, [#allocation4], 128, 128, 8
    $region5: #{tpu_custom_call.1} parent=1 // pred_fallthru
      _
    // Predicated region
    $region6: #{tpu_custom_call.1} parent=1 // pred_check
      _
    $region7: #{tpu_custom_call.1} parent=1 // pred_check_branch
      %24 = sbr.rel (0) target = $region9
    $region8: #{tpu_custom_call.1} parent=1 // pred_region
      %26 = vsyncadd [#allocation7], 0
      %s27 = sshll.u32 %s1, 4
      %s28 = int_to_ptr.hbm [resolvable:$true] %s27
      %s29 = sshll.u32 [#allocation6], 4
      %s30 = int_to_ptr.vmem [resolvable:$true] %s29
      %35 = dma.hbm_to_vmem [thread:$0]  %s28, 512, %s30, [#allocation7], 128, 128, 8
    $region9: #{tpu_custom_call.1} parent=1 // pred_fallthru
      _
    // Predicated region
    $region10: #{tpu_custom_call.1} parent=1 // pred_check
      _
    $region11: #{tpu_custom_call.1} parent=1 // pred_check_branch
      %37 = sbr.rel (0) target = $region13
    $region12: #{tpu_custom_call.1} parent=1 // pred_region
      %39 = dma.done [#allocation4], 256
    $region13: #{tpu_custom_call.1} parent=1 // pred_fallthru
      _
    // Predicated region
    $region14: #{tpu_custom_call.1} parent=1 // pred_check
      _
    $region15: #{tpu_custom_call.1} parent=1 // pred_check_branch
      %41 = sbr.rel (0) target = $region17
    $region16: #{tpu_custom_call.1} parent=1 // pred_region
      %43 = dma.done [#allocation7], 512
    $region17: #{tpu_custom_call.1} parent=1 // pred_fallthru
      _
    %p44 = scmp.eq.s32.totalorder 0, 0
    // Predicated region
    $region18: #{tpu_custom_call.1} parent=1 // pred_check
      %p45 = pneg %p44
    $region19: #{tpu_custom_call.1} parent=1 // pred_check_branch
      %47 = sbr.rel (%p45) target = $region21
    $region20: #{tpu_custom_call.1} parent=1 // pred_region
      %vm48 = vcmask 785408
      %49 = vst.msk [vmem:[#allocation2] sm:$0xff] %vm48, 0.0
      %50 = vst.msk [vmem:[#allocation2 + $0x8] sm:$0xff] %vm48, 0.0
    $region21: #{tpu_custom_call.1} parent=1 // pred_fallthru
      _
    %v51 = vld [vmem:[#allocation2] sm:$0xff]
    %v52 = vld [vmem:[#allocation2 + $0x8] sm:$0xff]
    %v53 = vld [vmem:[#allocation3] sm:$0xff]
    %v54 = vld [vmem:[#allocation3 + $0x8] sm:$0xff]
    %v55 = vld [vmem:[#allocation6] sm:$0xff]
    %v56 = vld [vmem:[#allocation6 + $0x8] sm:$0xff]
    %v57 = vld [vmem:[#allocation6 + $0x10] sm:$0xff]
    %v58 = vld [vmem:[#allocation6 + $0x18] sm:$0xff]
    %vm59 = vcmask 261120
    %v61 = vsel %vm59, %v53, 0
    %v64 = vsel %vm59, %v54, 0
    %66 = vmatpush.msra.mxu0 0.0
    %67 = vmatpush.msra.mxu0 0.0
    %68 = vmatpush.msra.mxu0 0.0
    %69 = vmatpush.msra.mxu0 0.0
    %70 = vmatpush.msra.mxu0 0.0
    %71 = vmatpush.msra.mxu0 0.0
    %72 = vmatpush.msra.mxu0 0.0
    %73 = vmatpush.msra.mxu0 0.0
    %74 = vmatpush.msra.mxu0 0.0
    %75 = vmatpush.msra.mxu0 0.0
    %76 = vmatpush.msra.mxu0 0.0
    %77 = vmatpush.msra.mxu0 0.0
    %78 = vmatpush.msra.mxu0 %v58
    %79 = vmatpush.msra.mxu0 %v57
    %80 = vmatpush.msra.mxu0 %v56
    %81 = vmatpush.msra.mxu0 %v55
    %82 = vmatmul.f32.gmra.mxu0 %v61
    %v83 = vpop.f32.mrf.mxu0
    %v84 = vadd.f32 0.0, %v83
    %85 = vmatmul.f32.gmra.mxu0 %v64
    %v86 = vpop.f32.mrf.mxu0
    %v87 = vadd.f32 0.0, %v86
    %88 = vdwg.mxu0
    %v89 = vadd.f32 %v51, %v84
    %v90 = vadd.f32 %v52, %v87
    %vm91 = vcmask 785408
    %92 = vst.msk [vmem:[#allocation2] sm:$0xff] %vm91, %v89
    %93 = vst.msk [vmem:[#allocation2 + $0x8] sm:$0xff] %vm91, %v90
    // Predicated region
    $region22: #{tpu_custom_call.1} parent=1 // pred_check
      %p94 = pneg %p44
    $region23: #{tpu_custom_call.1} parent=1 // pred_check_branch
      %96 = sbr.rel (%p94) target = $region25
    $region24: #{tpu_custom_call.1} parent=1 // pred_region
      %v97 = vld [vmem:[#allocation2] sm:$0xff]
      %v98 = vld [vmem:[#allocation2 + $0x8] sm:$0xff]
      %99 = vst.msk [vmem:[#allocation8] sm:$0xff] %vm91, %v97
      %100 = vst.msk [vmem:[#allocation8 + $0x8] sm:$0xff] %vm91, %v98
    $region25: #{tpu_custom_call.1} parent=1 // pred_fallthru
      _
    // Predicated region
    $region26: #{tpu_custom_call.1} parent=1 // pred_check
      _
    $region27: #{tpu_custom_call.1} parent=1 // pred_check_branch
      %102 = sbr.rel (0) target = $region29
    $region28: #{tpu_custom_call.1} parent=1 // pred_region
      %104 = vsyncadd [#allocation5], 0
      %s105 = sshll.u32 [#allocation8], 4
      %s106 = int_to_ptr.vmem [resolvable:$true] %s105
      %s107 = sshll.u32 %s2, 4
      %s108 = int_to_ptr.hbm [resolvable:$true] %s107
      %113 = dma.vmem_to_hbm [thread:$0]  %s106, 256, %s108, [#allocation5], 128, 128, 8
    $region29: #{tpu_custom_call.1} parent=1 // pred_fallthru
      _
    // Predicated region
    $region30: #{tpu_custom_call.1} parent=1 // pred_check
      _
    $region31: #{tpu_custom_call.1} parent=1 // pred_check_branch
      %115 = sbr.rel (0) target = $region33
    $region32: #{tpu_custom_call.1} parent=1 // pred_region
      %117 = dma.done [#allocation5], 256
    $region33: #{tpu_custom_call.1} parent=1 // pred_fallthru
      _
    %118 = vsyncpa [#allocation4], 1
    %119 = vsyncpa [#allocation7], 1
    %120 = vsyncpa [#allocation5], 1

</llo_original>
